<compile_context>
chip_gen: v5e
topology: v5e:2x2
jax: 0.10.0
libtpu: 0.0.40
codegen_flags: <defaults>
</compile_context>

<pallas_src>
import functools

import jax
import jax.numpy as jnp
from jax.experimental import pallas as pl
from jax.experimental.pallas import tpu as pltpu

# Model dims (fixed by the PyTorch spec).
D_IN = 7
D_H1 = 300
D_H2 = 100

# Packed input slab (sublane rows x batch lanes): x^T at [0:7], eps^T at [8:8+z].
_XIN_ROWS = 16
_EP_OFF = 8

# Fused head rows: ave at [0:z_dim], log_dev at [8:8+z_dim] (8-aligned split).
_HEAD_ROWS = 16
_LOGDEV_OFF = 8

# Packed column bias (rows, 1): every segment offset is a multiple of 8.
_B1_OFF = 0
_B2_OFF = 304
_BH_OFF = 408
_B_PACK_ROWS = _BH_OFF + _HEAD_ROWS  # 424

# Tiling knobs (sweep parameters).
_NO_GRID_MAX_B = 256  # at/below this a grid is pure per-step overhead (single TC)
_TILE_B = 1024        # review: 1024-2048; ~5 MiB/step, safe vs v5e 16 MiB scoped VMEM


def encoder_kernel(xin_ref, w1_ref, w2_ref, wh_ref, b_ref, out_ref):
    z_dim = out_ref.shape[0] // 3

    xin = xin_ref[...]                                    # (16, tb)

    # Packed bias slices (all sublane-aligned offsets).
    b1 = b_ref[_B1_OFF:_B1_OFF + D_H1, :]                 # (300, 1)
    b2 = b_ref[_B2_OFF:_B2_OFF + D_H2, :]                 # (100, 1)
    bh = b_ref[_BH_OFF:_BH_OFF + _HEAD_ROWS, :]           # (16, 1)

    # Layer 1: Linear(7, 300) + ReLU.  w1 columns 7..15 are zero, so the eps /
    # padding rows of the input slab contribute nothing.
    h1 = jnp.dot(w1_ref[...], xin, preferred_element_type=jnp.float32) + b1
    h1 = jnp.maximum(h1, 0.0)                              # (300, tb)

    # Layer 2: Linear(300, 100) + ReLU.
    h2 = jnp.dot(w2_ref[...], h1, preferred_element_type=jnp.float32) + b2
    h2 = jnp.maximum(h2, 0.0)                              # (100, tb)

    # Fused heads: one matmul; ave in rows [0:z], log_dev in rows [8:8+z].
    head = jnp.dot(wh_ref[...], h2, preferred_element_type=jnp.float32) + bh

    ave = head[0:z_dim, :]
    log_dev = head[_LOGDEV_OFF:_LOGDEV_OFF + z_dim, :]
    ep = xin[_EP_OFF:_EP_OFF + z_dim, :]

    # Reparameterization: z = ave + exp(log_dev / 2) * eps.
    z = ave + jnp.exp(log_dev * 0.5) * ep

    # Single fused, lane-dense store: rows = [z | ave | log_dev], lanes = batch.
    out_ref[...] = jnp.concatenate([z, ave, log_dev], axis=0).astype(out_ref.dtype)


def fuse_params(p):
    """One-time packing/transposition of the natural (in, out) params."""
    z_dim = p["wa"].shape[1]
    assert z_dim <= _XIN_ROWS - _EP_OFF
    assert z_dim <= _HEAD_ROWS - _LOGDEV_OFF

    w1_t = jnp.zeros((D_H1, _XIN_ROWS), jnp.float32)
    w1_t = w1_t.at[:, :D_IN].set(p["w1"].T)                # (300, 16), zero-padded

    w2_t = p["w2"].T.astype(jnp.float32)                   # (100, 300)

    wh_t = jnp.zeros((_HEAD_ROWS, D_H2), jnp.float32)      # (16, 100)
    wh_t = wh_t.at[0:z_dim, :].set(p["wa"].T)
    wh_t = wh_t.at[_LOGDEV_OFF:_LOGDEV_OFF + z_dim, :].set(p["wd"].T)

    b = jnp.zeros((_B_PACK_ROWS, 1), jnp.float32)
    b = b.at[_B1_OFF:_B1_OFF + D_H1, 0].set(p["b1"].reshape(-1))
    b = b.at[_B2_OFF:_B2_OFF + D_H2, 0].set(p["b2"].reshape(-1))
    b = b.at[_BH_OFF:_BH_OFF + z_dim, 0].set(p["ba"].reshape(-1))
    b = b.at[_BH_OFF + _LOGDEV_OFF:_BH_OFF + _LOGDEV_OFF + z_dim, 0].set(
        p["bd"].reshape(-1))

    return {"w1": w1_t, "w2": w2_t, "wh": wh_t, "b": b}


def _round_up(n, m):
    return ((n + m - 1) // m) * m


def _pack_inputs(x, ep):
    """(B,7) x and (B,z) eps -> one (16, B) lane-dense slab."""
    B = x.shape[0]
    z_dim = ep.shape[1]
    xin = jnp.zeros((_XIN_ROWS, B), jnp.float32)
    xin = xin.at[0:D_IN, :].set(x.T)
    xin = xin.at[_EP_OFF:_EP_OFF + z_dim, :].set(ep.T)
    return xin


def encoder_forward(x, fp, ep):
    """x: (B, 7) f32.  fp: fuse_params(...).  ep: (B, z_dim) N(0,1) noise.

    Returns (z, ave, log_dev), each (B, z_dim) f32 — same as the PyTorch module.
    """
    B = x.shape[0]
    z_dim = ep.shape[1]
    assert z_dim <= _XIN_ROWS - _EP_OFF

    xin = _pack_inputs(x, ep)
    inputs = (xin, fp["w1"], fp["w2"], fp["wh"], fp["b"])
    out_shape = jax.ShapeDtypeStruct((3 * z_dim, B), jnp.float32)

    weight_bytes = 4 * (fp["w1"].size + fp["w2"].size + fp["wh"].size + fp["b"].size)
    cost = pl.CostEstimate(
        flops=2 * B * (D_IN * D_H1 + D_H1 * D_H2 + D_H2 * 2 * z_dim),
        transcendentals=B * z_dim,
        bytes_accessed=4 * (xin.size + 3 * z_dim * B) + weight_bytes,
    )

    if B <= _NO_GRID_MAX_B:
        # Tiny batch: no grid — every operand is one full-array VMEM block, so
        # there is no software-pipeline / double-buffer bookkeeping at all.
        vmem = functools.partial(pl.BlockSpec, memory_space=pltpu.MemorySpace.VMEM)
        out = pl.pallas_call(
            encoder_kernel,
            out_shape=out_shape,
            in_specs=[vmem() for _ in inputs],
            out_specs=vmem(),
            cost_estimate=cost,
        )(*inputs)
    else:
        # Larger batch: tile over the batch (lane) axis.  Use at least 2 grid
        # steps so both v7x TensorCores get work; cap the tile at _TILE_B.
        tb = max(128, min(_TILE_B, _round_up(pl.cdiv(B, 2), 128)))
        grid = (pl.cdiv(B, tb),)
        in_specs = [
            pl.BlockSpec((_XIN_ROWS, tb), lambda i: (0, i)),
            pl.BlockSpec((D_H1, _XIN_ROWS), lambda i: (0, 0)),   # weights resident
            pl.BlockSpec((D_H2, D_H1), lambda i: (0, 0)),
            pl.BlockSpec((_HEAD_ROWS, D_H2), lambda i: (0, 0)),
            pl.BlockSpec((_B_PACK_ROWS, 1), lambda i: (0, 0)),
        ]
        out_specs = pl.BlockSpec((3 * z_dim, tb), lambda i: (0, i))
        out = pl.pallas_call(
            encoder_kernel,
            out_shape=out_shape,
            grid=grid,
            in_specs=in_specs,
            out_specs=out_specs,
            cost_estimate=cost,
            compiler_params=pltpu.CompilerParams(
                dimension_semantics=("parallel",),
                vmem_limit_bytes=32 * 1024 * 1024,
            ),
        )(*inputs)

    # Layout plumbing back to the module's (B, z_dim) orientation.
    z = out[0:z_dim, :].T
    ave = out[z_dim:2 * z_dim, :].T
    log_dev = out[2 * z_dim:, :].T
    return z, ave, log_dev


def init_params(key, z_dim=2):
    """Deterministic synthetic init. Weights stored as (in, out)."""
    ks = jax.random.split(key, 8)

    def w(k, shape, fan_in):
        return jax.random.normal(k, shape, jnp.float32) / jnp.sqrt(fan_in)

    return {
        "w1": w(ks[0], (D_IN, D_H1), D_IN),
        "b1": w(ks[1], (1, D_H1), D_IN),
        "w2": w(ks[2], (D_H1, D_H2), D_H1),
        "b2": w(ks[3], (1, D_H2), D_H1),
        "wa": w(ks[4], (D_H2, z_dim), D_H2),
        "ba": w(ks[5], (1, z_dim), D_H2),
        "wd": w(ks[6], (D_H2, z_dim), D_H2),
        "bd": w(ks[7], (1, z_dim), D_H2),
    }


if __name__ == "__main__":
    key = jax.random.PRNGKey(0)
    k_params, k_x, k_ep, k_x2, k_ep2 = jax.random.split(key, 5)

    z_dim = 2
    params = init_params(k_params, z_dim=z_dim)
    fused = fuse_params(params)  # one-time packing, not in the per-call path

    def reference(xv, epv):
        h1 = jnp.maximum(xv @ params["w1"] + params["b1"], 0.0)
        h2 = jnp.maximum(h1 @ params["w2"] + params["b2"], 0.0)
        ave_r = h2 @ params["wa"] + params["ba"]
        dev_r = h2 @ params["wd"] + params["bd"]
        z_r = ave_r + jnp.exp(dev_r / 2.0) * epv
        return z_r, ave_r, dev_r

    fwd = jax.jit(encoder_forward)

    # --- Small batch -> no-grid path ------------------------------------
    B = 8
    x = jax.random.normal(k_x, (B, D_IN), jnp.float32)
    # eps ~ N(0, I): mirrors torch.randn_like(ave); generated in-wrapper for
    # determinism and passed into the kernel.
    ep = jax.random.normal(k_ep, (B, z_dim), jnp.float32)
    z, ave, log_dev = fwd(x, fused, ep)
    jax.block_until_ready((z, ave, log_dev))
    z_r, a_r, d_r = reference(x, ep)
    assert jnp.allclose(ave, a_r, atol=1e-4, rtol=1e-4)
    assert jnp.allclose(log_dev, d_r, atol=1e-4, rtol=1e-4)
    assert jnp.allclose(z, z_r, atol=1e-4, rtol=1e-4)

    # --- Larger batch -> lane-tiled grid path (2 parallel steps) ---------
    B2 = 512
    x2 = jax.random.normal(k_x2, (B2, D_IN), jnp.float32)
    ep2 = jax.random.normal(k_ep2, (B2, z_dim), jnp.float32)
    z2, a2, d2 = fwd(x2, fused, ep2)
    jax.block_until_ready((z2, a2, d2))
    z2_r, a2_r, d2_r = reference(x2, ep2)
    assert jnp.allclose(a2, a2_r, atol=1e-4, rtol=1e-4)
    assert jnp.allclose(d2, d2_r, atol=1e-4, rtol=1e-4)
    assert jnp.allclose(z2, z2_r, atol=1e-4, rtol=1e-4)

    print("KERNEL_OK")
</pallas_src>

<mosaic_0001>
module attributes {stable_mosaic.version = 11 : i64} {
  func.func @encoder_kernel(%arg0: memref<16x8xf32, #tpu.memory_space<vmem>>, %arg1: memref<300x16xf32, #tpu.memory_space<vmem>>, %arg2: memref<100x300xf32, #tpu.memory_space<vmem>>, %arg3: memref<16x100xf32, #tpu.memory_space<vmem>>, %arg4: memref<424x1xf32, #tpu.memory_space<vmem>>, %arg5: memref<6x8xf32, #tpu.memory_space<vmem>>) attributes {dimension_semantics = [], scalar_prefetch = 0 : i64, scratch_operands = 0 : i64, tpu.core_type = #tpu.core_type<tc>} {
    %c0 = arith.constant 0 : index
    %c0_0 = arith.constant 0 : index
    %0 = vector.load %arg0[%c0, %c0_0] : memref<16x8xf32, #tpu.memory_space<vmem>>, vector<16x8xf32>
    %c0_1 = arith.constant 0 : index
    %c0_2 = arith.constant 0 : index
    %1 = vector.load %arg4[%c0_1, %c0_2] : memref<424x1xf32, #tpu.memory_space<vmem>>, vector<300x1xf32>
    %c304 = arith.constant 304 : index
    %c0_3 = arith.constant 0 : index
    %2 = vector.load %arg4[%c304, %c0_3] : memref<424x1xf32, #tpu.memory_space<vmem>>, vector<100x1xf32>
    %c408 = arith.constant 408 : index
    %c0_4 = arith.constant 0 : index
    %3 = vector.load %arg4[%c408, %c0_4] : memref<424x1xf32, #tpu.memory_space<vmem>>, vector<16x1xf32>
    %c0_5 = arith.constant 0 : index
    %c0_6 = arith.constant 0 : index
    %4 = vector.load %arg1[%c0_5, %c0_6] : memref<300x16xf32, #tpu.memory_space<vmem>>, vector<300x16xf32>
    %cst = arith.constant dense<0.000000e+00> : vector<300x8xf32>
    %5 = tpu.matmul %4, %0, %cst {dimension_numbers = #tpu.dot_dimension_numbers<[1], [0], [0], [1], [0, 0, 1, 1], [], []>} : vector<300x16xf32>, vector<16x8xf32>, vector<300x8xf32> -> vector<300x8xf32>
    %6 = vector.broadcast %1 : vector<300x1xf32> to vector<300x8xf32>
    %7 = arith.addf %5, %6 : vector<300x8xf32>
    %cst_7 = arith.constant 0.000000e+00 : f32
    %8 = vector.broadcast %cst_7 : f32 to vector<300x8xf32>
    %9 = arith.maximumf %7, %8 : vector<300x8xf32>
    %c0_8 = arith.constant 0 : index
    %c0_9 = arith.constant 0 : index
    %10 = vector.load %arg2[%c0_8, %c0_9] : memref<100x300xf32, #tpu.memory_space<vmem>>, vector<100x300xf32>
    %cst_10 = arith.constant dense<0.000000e+00> : vector<100x8xf32>
    %11 = tpu.matmul %10, %9, %cst_10 {dimension_numbers = #tpu.dot_dimension_numbers<[1], [0], [0], [1], [0, 0, 1, 1], [], []>} : vector<100x300xf32>, vector<300x8xf32>, vector<100x8xf32> -> vector<100x8xf32>
    %12 = vector.broadcast %2 : vector<100x1xf32> to vector<100x8xf32>
    %13 = arith.addf %11, %12 : vector<100x8xf32>
    %cst_11 = arith.constant 0.000000e+00 : f32
    %14 = vector.broadcast %cst_11 : f32 to vector<100x8xf32>
    %15 = arith.maximumf %13, %14 : vector<100x8xf32>
    %c0_12 = arith.constant 0 : index
    %c0_13 = arith.constant 0 : index
    %16 = vector.load %arg3[%c0_12, %c0_13] : memref<16x100xf32, #tpu.memory_space<vmem>>, vector<16x100xf32>
    %cst_14 = arith.constant dense<0.000000e+00> : vector<16x8xf32>
    %17 = tpu.matmul %16, %15, %cst_14 {dimension_numbers = #tpu.dot_dimension_numbers<[1], [0], [0], [1], [0, 0, 1, 1], [], []>} : vector<16x100xf32>, vector<100x8xf32>, vector<16x8xf32> -> vector<16x8xf32>
    %18 = vector.broadcast %3 : vector<16x1xf32> to vector<16x8xf32>
    %19 = arith.addf %17, %18 : vector<16x8xf32>
    %20 = vector.extract_strided_slice %19 {offsets = [0, 0], sizes = [2, 8], strides = [1, 1]} : vector<16x8xf32> to vector<2x8xf32>
    %21 = vector.extract_strided_slice %19 {offsets = [8, 0], sizes = [2, 8], strides = [1, 1]} : vector<16x8xf32> to vector<2x8xf32>
    %22 = vector.extract_strided_slice %0 {offsets = [8, 0], sizes = [2, 8], strides = [1, 1]} : vector<16x8xf32> to vector<2x8xf32>
    %cst_15 = arith.constant 5.000000e-01 : f32
    %23 = vector.broadcast %cst_15 : f32 to vector<2x8xf32>
    %24 = arith.mulf %21, %23 : vector<2x8xf32>
    %25 = math.exp %24 : vector<2x8xf32>
    %26 = arith.mulf %25, %22 : vector<2x8xf32>
    %27 = arith.addf %20, %26 : vector<2x8xf32>
    %28 = tpu.concatenate %27, %20, %21 in 0 : vector<2x8xf32>, vector<2x8xf32>, vector<2x8xf32> -> vector<6x8xf32>
    %c0_16 = arith.constant 0 : index
    %c0_17 = arith.constant 0 : index
    %29 = vector.load %arg5[%c0_16, %c0_17] : memref<6x8xf32, #tpu.memory_space<vmem>>, vector<6x8xf32>
    tpu.vector_store %arg5[%c0_16, %c0_17], %28 {strides = array<i32>} : memref<6x8xf32, #tpu.memory_space<vmem>>, vector<6x8xf32>,
    return
  }
}

</mosaic_0001>

<llo_original>
// kernel: encoder_forward.1
$region0: #{encoder_forward.1}
  #allocation0 [shape = 'u32[]', space=smem, size = 0x4, offset = 0x4, fixed_abs, tag = 'smem constant byte address 0x4 - core index']
  #allocation1 [shape = 'u32[72,128]{1,0:T(1,128)}', space=vmem, size = 0x9000, scoped, tag = 'internal scratch']
  %s0 = inlined_call_operand.vmem [shape: f32[16,8], index: 0, kind: input, shape index: {}]
  %s1 = inlined_call_operand.vmem [shape: f32[300,16], index: 1, kind: input, shape index: {}]
  %s2 = inlined_call_operand.vmem [shape: f32[100,300], index: 2, kind: input, shape index: {}]
  %s3 = inlined_call_operand.vmem [shape: f32[16,100], index: 3, kind: input, shape index: {}]
  %s4 = inlined_call_operand.vmem [shape: f32[424,1], index: 4, kind: input, shape index: {}]
  %s5 = inlined_call_operand.vmem [shape: f32[6,8], index: 5, kind: output, shape index: {}]
  %s6 = sld [smem:[#allocation0]]
  $region30: #{encoder_forward.1} parent=0
    _
  %s8 = ssub.s32 1, %s6
  %s9 = scalar_select 0, %s8, %s6
  // Predicated region
  $region2: #{encoder_forward.1} parent=0 // pred_check
    _
  $region3: #{encoder_forward.1} parent=0 // pred_check_branch
    %11 = sbr.rel (0) target = $region5
  $region4: #{encoder_forward.1} parent=0 // pred_region
    _
  $region5: #{encoder_forward.1} parent=0 // pred_fallthru
    _
  // Predicated region
  $region6: #{encoder_forward.1} parent=0 // pred_check
    _
  $region7: #{encoder_forward.1} parent=0 // pred_check_branch
    %13 = sbr.rel (0) target = $region9
  $region8: #{encoder_forward.1} parent=0 // pred_region
    _
  $region9: #{encoder_forward.1} parent=0 // pred_fallthru
    _
  // Predicated region
  $region10: #{encoder_forward.1} parent=0 // pred_check
    _
  $region11: #{encoder_forward.1} parent=0 // pred_check_branch
    %15 = sbr.rel (0) target = $region13
  $region12: #{encoder_forward.1} parent=0 // pred_region
    _
  $region13: #{encoder_forward.1} parent=0 // pred_fallthru
    _
  // Predicated region
  $region14: #{encoder_forward.1} parent=0 // pred_check
    _
  $region15: #{encoder_forward.1} parent=0 // pred_check_branch
    %17 = sbr.rel (0) target = $region17
  $region16: #{encoder_forward.1} parent=0 // pred_region
    _
  $region17: #{encoder_forward.1} parent=0 // pred_fallthru
    _
  // Predicated region
  $region18: #{encoder_forward.1} parent=0 // pred_check
    _
  $region19: #{encoder_forward.1} parent=0 // pred_check_branch
    %19 = sbr.rel (0) target = $region21
  $region20: #{encoder_forward.1} parent=0 // pred_region
    _
  $region21: #{encoder_forward.1} parent=0 // pred_fallthru
    _
  %v20 = vld [vmem:[%s0] sm:$0xff]
  %v21 = vld [vmem:[%s0 + $0x8] sm:$0xff]
  %v22 = vld [vmem:[%s4] sm:$0xff]
  %v23 = vld [vmem:[%s4 + $0x8] sm:$0xff]
  %v24 = vld [vmem:[%s4 + $0x10] sm:$0xff]
  %v25 = vld [vmem:[%s4 + $0x18] sm:$0xff]
  %v26 = vld [vmem:[%s4 + $0x20] sm:$0xff]
  %v27 = vld [vmem:[%s4 + $0x28] sm:$0xff]
  %v28 = vld [vmem:[%s4 + $0x30] sm:$0xff]
  %v29 = vld [vmem:[%s4 + $0x38] sm:$0xff]
  %v30 = vld [vmem:[%s4 + $0x40] sm:$0xff]
  %v31 = vld [vmem:[%s4 + $0x48] sm:$0xff]
  %v32 = vld [vmem:[%s4 + $0x50] sm:$0xff]
  %v33 = vld [vmem:[%s4 + $0x58] sm:$0xff]
  %v34 = vld [vmem:[%s4 + $0x60] sm:$0xff]
  %v35 = vld [vmem:[%s4 + $0x68] sm:$0xff]
  %v36 = vld [vmem:[%s4 + $0x70] sm:$0xff]
  %v37 = vld [vmem:[%s4 + $0x78] sm:$0xff]
  %v38 = vld [vmem:[%s4 + $0x80] sm:$0xff]
  %v39 = vld [vmem:[%s4 + $0x88] sm:$0xff]
  %v40 = vld [vmem:[%s4 + $0x90] sm:$0xff]
  %v41 = vld [vmem:[%s4 + $0x98] sm:$0xff]
  %v42 = vld [vmem:[%s4 + $0xa0] sm:$0xff]
  %v43 = vld [vmem:[%s4 + $0xa8] sm:$0xff]
  %v44 = vld [vmem:[%s4 + $0xb0] sm:$0xff]
  %v45 = vld [vmem:[%s4 + $0xb8] sm:$0xff]
  %v46 = vld [vmem:[%s4 + $0xc0] sm:$0xff]
  %v47 = vld [vmem:[%s4 + $0xc8] sm:$0xff]
  %v48 = vld [vmem:[%s4 + $0xd0] sm:$0xff]
  %v49 = vld [vmem:[%s4 + $0xd8] sm:$0xff]
  %v50 = vld [vmem:[%s4 + $0xe0] sm:$0xff]
  %v51 = vld [vmem:[%s4 + $0xe8] sm:$0xff]
  %v52 = vld [vmem:[%s4 + $0xf0] sm:$0xff]
  %v53 = vld [vmem:[%s4 + $0xf8] sm:$0xff]
  %v54 = vld [vmem:[%s4 + $0x100] sm:$0xff]
  %v55 = vld [vmem:[%s4 + $0x108] sm:$0xff]
  %v56 = vld [vmem:[%s4 + $0x110] sm:$0xff]
  %v57 = vld [vmem:[%s4 + $0x118] sm:$0xff]
  %v58 = vld [vmem:[%s4 + $0x120] sm:$0xff]
  %v59 = vld [vmem:[%s4 + $0x128] sm:$0xf]
  %v60 = vld [vmem:[%s4 + $0x130] sm:$0xff]
  %v61 = vld [vmem:[%s4 + $0x138] sm:$0xff]
  %v62 = vld [vmem:[%s4 + $0x140] sm:$0xff]
  %v63 = vld [vmem:[%s4 + $0x148] sm:$0xff]
  %v64 = vld [vmem:[%s4 + $0x150] sm:$0xff]
  %v65 = vld [vmem:[%s4 + $0x158] sm:$0xff]
  %v66 = vld [vmem:[%s4 + $0x160] sm:$0xff]
  %v67 = vld [vmem:[%s4 + $0x168] sm:$0xff]
  %v68 = vld [vmem:[%s4 + $0x170] sm:$0xff]
  %v69 = vld [vmem:[%s4 + $0x178] sm:$0xff]
  %v70 = vld [vmem:[%s4 + $0x180] sm:$0xff]
  %v71 = vld [vmem:[%s4 + $0x188] sm:$0xff]
  %v72 = vld [vmem:[%s4 + $0x190] sm:$0xf]
  %v73 = vld [vmem:[%s4 + $0x198] sm:$0xff]
  %v74 = vld [vmem:[%s4 + $0x1a0] sm:$0xff]
  %v75 = vld [vmem:[%s1] sm:$0xff]
  %v76 = vld [vmem:[%s1 + $0x8] sm:$0xff]
  %v77 = vld [vmem:[%s1 + $0x10] sm:$0xff]
  %v78 = vld [vmem:[%s1 + $0x18] sm:$0xff]
  %v79 = vld [vmem:[%s1 + $0x20] sm:$0xff]
  %v80 = vld [vmem:[%s1 + $0x28] sm:$0xff]
  %v81 = vld [vmem:[%s1 + $0x30] sm:$0xff]
  %v82 = vld [vmem:[%s1 + $0x38] sm:$0xff]
  %v83 = vld [vmem:[%s1 + $0x40] sm:$0xff]
  %v84 = vld [vmem:[%s1 + $0x48] sm:$0xff]
  %v85 = vld [vmem:[%s1 + $0x50] sm:$0xff]
  %v86 = vld [vmem:[%s1 + $0x58] sm:$0xff]
  %v87 = vld [vmem:[%s1 + $0x60] sm:$0xff]
  %v88 = vld [vmem:[%s1 + $0x68] sm:$0xff]
  %v89 = vld [vmem:[%s1 + $0x70] sm:$0xff]
  %v90 = vld [vmem:[%s1 + $0x78] sm:$0xff]
  %v91 = vld [vmem:[%s1 + $0x80] sm:$0xff]
  %v92 = vld [vmem:[%s1 + $0x88] sm:$0xff]
  %v93 = vld [vmem:[%s1 + $0x90] sm:$0xff]
  %v94 = vld [vmem:[%s1 + $0x98] sm:$0xff]
  %v95 = vld [vmem:[%s1 + $0xa0] sm:$0xff]
  %v96 = vld [vmem:[%s1 + $0xa8] sm:$0xff]
  %v97 = vld [vmem:[%s1 + $0xb0] sm:$0xff]
  %v98 = vld [vmem:[%s1 + $0xb8] sm:$0xff]
  %v99 = vld [vmem:[%s1 + $0xc0] sm:$0xff]
  %v100 = vld [vmem:[%s1 + $0xc8] sm:$0xff]
  %v101 = vld [vmem:[%s1 + $0xd0] sm:$0xff]
  %v102 = vld [vmem:[%s1 + $0xd8] sm:$0xff]
  %v103 = vld [vmem:[%s1 + $0xe0] sm:$0xff]
  %v104 = vld [vmem:[%s1 + $0xe8] sm:$0xff]
  %v105 = vld [vmem:[%s1 + $0xf0] sm:$0xff]
  %v106 = vld [vmem:[%s1 + $0xf8] sm:$0xff]
  %v107 = vld [vmem:[%s1 + $0x100] sm:$0xff]
  %v108 = vld [vmem:[%s1 + $0x108] sm:$0xff]
  %v109 = vld [vmem:[%s1 + $0x110] sm:$0xff]
  %v110 = vld [vmem:[%s1 + $0x118] sm:$0xff]
  %v111 = vld [vmem:[%s1 + $0x120] sm:$0xff]
  %v112 = vld [vmem:[%s1 + $0x128] sm:$0xf]
  %114 = vset.pattern.permute.xlu0 0
  %115 = vperm.xlu0 %114, %v22
  %v116 = vpop.permute.xlu0 %115
  %119 = vset.pattern.permute.xlu0 0
  %120 = vperm.xlu0 %119, %v23
  %v121 = vpop.permute.xlu0 %120
  %124 = vset.pattern.permute.xlu0 0
  %125 = vperm.xlu0 %124, %v24
  %v126 = vpop.permute.xlu0 %125
  %129 = vset.pattern.permute.xlu0 0
  %130 = vperm.xlu0 %129, %v25
  %v131 = vpop.permute.xlu0 %130
  %134 = vset.pattern.permute.xlu0 0
  %135 = vperm.xlu0 %134, %v26
  %v136 = vpop.permute.xlu0 %135
  %139 = vset.pattern.permute.xlu0 0
  %140 = vperm.xlu0 %139, %v27
  %v141 = vpop.permute.xlu0 %140
  %144 = vset.pattern.permute.xlu0 0
  %145 = vperm.xlu0 %144, %v28
  %v146 = vpop.permute.xlu0 %145
  %149 = vset.pattern.permute.xlu0 0
  %150 = vperm.xlu0 %149, %v29
  %v151 = vpop.permute.xlu0 %150
  %154 = vset.pattern.permute.xlu0 0
  %155 = vperm.xlu0 %154, %v30
  %v156 = vpop.permute.xlu0 %155
  %159 = vset.pattern.permute.xlu0 0
  %160 = vperm.xlu0 %159, %v31
  %v161 = vpop.permute.xlu0 %160
  %164 = vset.pattern.permute.xlu0 0
  %165 = vperm.xlu0 %164, %v32
  %v166 = vpop.permute.xlu0 %165
  %169 = vset.pattern.permute.xlu0 0
  %170 = vperm.xlu0 %169, %v33
  %v171 = vpop.permute.xlu0 %170
  %174 = vset.pattern.permute.xlu0 0
  %175 = vperm.xlu0 %174, %v34
  %v176 = vpop.permute.xlu0 %175
  %179 = vset.pattern.permute.xlu0 0
  %180 = vperm.xlu0 %179, %v35
  %v181 = vpop.permute.xlu0 %180
  %184 = vset.pattern.permute.xlu0 0
  %185 = vperm.xlu0 %184, %v36
  %v186 = vpop.permute.xlu0 %185
  %189 = vset.pattern.permute.xlu0 0
  %190 = vperm.xlu0 %189, %v37
  %v191 = vpop.permute.xlu0 %190
  %194 = vset.pattern.permute.xlu0 0
  %195 = vperm.xlu0 %194, %v38
  %v196 = vpop.permute.xlu0 %195
  %199 = vset.pattern.permute.xlu0 0
  %200 = vperm.xlu0 %199, %v39
  %v201 = vpop.permute.xlu0 %200
  %204 = vset.pattern.permute.xlu0 0
  %205 = vperm.xlu0 %204, %v40
  %v206 = vpop.permute.xlu0 %205
  %209 = vset.pattern.permute.xlu0 0
  %210 = vperm.xlu0 %209, %v41
  %v211 = vpop.permute.xlu0 %210
  %214 = vset.pattern.permute.xlu0 0
  %215 = vperm.xlu0 %214, %v42
  %v216 = vpop.permute.xlu0 %215
  %219 = vset.pattern.permute.xlu0 0
  %220 = vperm.xlu0 %219, %v43
  %v221 = vpop.permute.xlu0 %220
  %224 = vset.pattern.permute.xlu0 0
  %225 = vperm.xlu0 %224, %v44
  %v226 = vpop.permute.xlu0 %225
  %229 = vset.pattern.permute.xlu0 0
  %230 = vperm.xlu0 %229, %v45
  %v231 = vpop.permute.xlu0 %230
  %234 = vset.pattern.permute.xlu0 0
  %235 = vperm.xlu0 %234, %v46
  %v236 = vpop.permute.xlu0 %235
  %239 = vset.pattern.permute.xlu0 0
  %240 = vperm.xlu0 %239, %v47
  %v241 = vpop.permute.xlu0 %240
  %244 = vset.pattern.permute.xlu0 0
  %245 = vperm.xlu0 %244, %v48
  %v246 = vpop.permute.xlu0 %245
  %249 = vset.pattern.permute.xlu0 0
  %250 = vperm.xlu0 %249, %v49
  %v251 = vpop.permute.xlu0 %250
  %254 = vset.pattern.permute.xlu0 0
  %255 = vperm.xlu0 %254, %v50
  %v256 = vpop.permute.xlu0 %255
  %259 = vset.pattern.permute.xlu0 0
  %260 = vperm.xlu0 %259, %v51
  %v261 = vpop.permute.xlu0 %260
  %264 = vset.pattern.permute.xlu0 0
  %265 = vperm.xlu0 %264, %v52
  %v266 = vpop.permute.xlu0 %265
  %269 = vset.pattern.permute.xlu0 0
  %270 = vperm.xlu0 %269, %v53
  %v271 = vpop.permute.xlu0 %270
  %274 = vset.pattern.permute.xlu0 0
  %275 = vperm.xlu0 %274, %v54
  %v276 = vpop.permute.xlu0 %275
  %279 = vset.pattern.permute.xlu0 0
  %280 = vperm.xlu0 %279, %v55
  %v281 = vpop.permute.xlu0 %280
  %284 = vset.pattern.permute.xlu0 0
  %285 = vperm.xlu0 %284, %v56
  %v286 = vpop.permute.xlu0 %285
  %289 = vset.pattern.permute.xlu0 0
  %290 = vperm.xlu0 %289, %v57
  %v291 = vpop.permute.xlu0 %290
  %294 = vset.pattern.permute.xlu0 0
  %295 = vperm.xlu0 %294, %v58
  %v296 = vpop.permute.xlu0 %295
  %299 = vset.pattern.permute.xlu0 0
  %300 = vperm.xlu0 %299, %v59
  %v301 = vpop.permute.xlu0 %300
  %vm303 = vcmask 130048
  %v305 = vsel %vm303, %v75, 0
  %v308 = vsel %vm303, %v76, 0
  %v311 = vsel %vm303, %v77, 0
  %v314 = vsel %vm303, %v78, 0
  %v317 = vsel %vm303, %v79, 0
  %v320 = vsel %vm303, %v80, 0
  %v323 = vsel %vm303, %v81, 0
  %v326 = vsel %vm303, %v82, 0
  %v329 = vsel %vm303, %v83, 0
  %v332 = vsel %vm303, %v84, 0
  %v335 = vsel %vm303, %v85, 0
  %v338 = vsel %vm303, %v86, 0
  %v341 = vsel %vm303, %v87, 0
  %v344 = vsel %vm303, %v88, 0
  %v347 = vsel %vm303, %v89, 0
  %v350 = vsel %vm303, %v90, 0
  %v353 = vsel %vm303, %v91, 0
  %v356 = vsel %vm303, %v92, 0
  %v359 = vsel %vm303, %v93, 0
  %v362 = vsel %vm303, %v94, 0
  %v365 = vsel %vm303, %v95, 0
  %v368 = vsel %vm303, %v96, 0
  %v371 = vsel %vm303, %v97, 0
  %v374 = vsel %vm303, %v98, 0
  %v377 = vsel %vm303, %v99, 0
  %v380 = vsel %vm303, %v100, 0
  %v383 = vsel %vm303, %v101, 0
  %v386 = vsel %vm303, %v102, 0
  %v389 = vsel %vm303, %v103, 0
  %v392 = vsel %vm303, %v104, 0
  %v395 = vsel %vm303, %v105, 0
  %v398 = vsel %vm303, %v106, 0
  %v401 = vsel %vm303, %v107, 0
  %v404 = vsel %vm303, %v108, 0
  %v407 = vsel %vm303, %v109, 0
  %v410 = vsel %vm303, %v110, 0
  %v413 = vsel %vm303, %v111, 0
  %v416 = vsel %vm303, %v112, 0
  %418 = vmatpush.msra.mxu0 0.0
  %419 = vmatpush.msra.mxu0 0.0
  %420 = vmatpush.msra.mxu0 0.0
  %421 = vmatpush.msra.mxu0 0.0
  %422 = vmatpush.msra.mxu0 0.0
  %423 = vmatpush.msra.mxu0 0.0
  %424 = vmatpush.msra.mxu0 0.0
  %425 = vmatpush.msra.mxu0 0.0
  %426 = vmatpush.msra.mxu0 0.0
  %427 = vmatpush.msra.mxu0 0.0
  %428 = vmatpush.msra.mxu0 0.0
  %429 = vmatpush.msra.mxu0 0.0
  %430 = vmatpush.msra.mxu0 0.0
  %431 = vmatpush.msra.mxu0 0.0
  %432 = vmatpush.msra.mxu0 %v21
  %433 = vmatpush.msra.mxu0 %v20
  %434 = vmatmul.f32.gmra.mxu0 %v305
  %v435 = vpop.f32.mrf.mxu0
  %v436 = vadd.f32 %v116, %v435
  %437 = vmatmul.f32.gmra.mxu0 %v308
  %v438 = vpop.f32.mrf.mxu0
  %v439 = vadd.f32 %v121, %v438
  %440 = vmatmul.f32.gmra.mxu0 %v311
  %v441 = vpop.f32.mrf.mxu0
  %v442 = vadd.f32 %v126, %v441
  %443 = vmatmul.f32.gmra.mxu0 %v314
  %v444 = vpop.f32.mrf.mxu0
  %v445 = vadd.f32 %v131, %v444
  %446 = vmatmul.f32.gmra.mxu0 %v317
  %v447 = vpop.f32.mrf.mxu0
  %v448 = vadd.f32 %v136, %v447
  %449 = vmatmul.f32.gmra.mxu0 %v320
  %v450 = vpop.f32.mrf.mxu0
  %v451 = vadd.f32 %v141, %v450
  %452 = vmatmul.f32.gmra.mxu0 %v323
  %v453 = vpop.f32.mrf.mxu0
  %v454 = vadd.f32 %v146, %v453
  %455 = vmatmul.f32.gmra.mxu0 %v326
  %v456 = vpop.f32.mrf.mxu0
  %v457 = vadd.f32 %v151, %v456
  %458 = vmatmul.f32.gmra.mxu0 %v329
  %v459 = vpop.f32.mrf.mxu0
  %v460 = vadd.f32 %v156, %v459
  %461 = vmatmul.f32.gmra.mxu0 %v332
  %v462 = vpop.f32.mrf.mxu0
  %v463 = vadd.f32 %v161, %v462
  %464 = vmatmul.f32.gmra.mxu0 %v335
  %v465 = vpop.f32.mrf.mxu0
  %v466 = vadd.f32 %v166, %v465
  %467 = vmatmul.f32.gmra.mxu0 %v338
  %v468 = vpop.f32.mrf.mxu0
  %v469 = vadd.f32 %v171, %v468
  %470 = vmatmul.f32.gmra.mxu0 %v341
  %v471 = vpop.f32.mrf.mxu0
  %v472 = vadd.f32 %v176, %v471
  %473 = vmatmul.f32.gmra.mxu0 %v344
  %v474 = vpop.f32.mrf.mxu0
  %v475 = vadd.f32 %v181, %v474
  %476 = vmatmul.f32.gmra.mxu0 %v347
  %v477 = vpop.f32.mrf.mxu0
  %v478 = vadd.f32 %v186, %v477
  %479 = vmatmul.f32.gmra.mxu0 %v350
  %v480 = vpop.f32.mrf.mxu0
  %v481 = vadd.f32 %v191, %v480
  %482 = vmatmul.f32.gmra.mxu0 %v353
  %v483 = vpop.f32.mrf.mxu0
  %v484 = vadd.f32 %v196, %v483
  %485 = vmatmul.f32.gmra.mxu0 %v356
  %v486 = vpop.f32.mrf.mxu0
  %v487 = vadd.f32 %v201, %v486
  %488 = vmatmul.f32.gmra.mxu0 %v359
  %v489 = vpop.f32.mrf.mxu0
  %v490 = vadd.f32 %v206, %v489
  %491 = vmatmul.f32.gmra.mxu0 %v362
  %v492 = vpop.f32.mrf.mxu0
  %v493 = vadd.f32 %v211, %v492
  %494 = vmatmul.f32.gmra.mxu0 %v365
  %v495 = vpop.f32.mrf.mxu0
  %v496 = vadd.f32 %v216, %v495
  %497 = vmatmul.f32.gmra.mxu0 %v368
  %v498 = vpop.f32.mrf.mxu0
  %v499 = vadd.f32 %v221, %v498
  %500 = vmatmul.f32.gmra.mxu0 %v371
  %v501 = vpop.f32.mrf.mxu0
  %v502 = vadd.f32 %v226, %v501
  %503 = vmatmul.f32.gmra.mxu0 %v374
  %v504 = vpop.f32.mrf.mxu0
  %v505 = vadd.f32 %v231, %v504
  %506 = vmatmul.f32.gmra.mxu0 %v377
  %v507 = vpop.f32.mrf.mxu0
  %v508 = vadd.f32 %v236, %v507
  %509 = vmatmul.f32.gmra.mxu0 %v380
  %v510 = vpop.f32.mrf.mxu0
  %v511 = vadd.f32 %v241, %v510
  %512 = vmatmul.f32.gmra.mxu0 %v383
  %v513 = vpop.f32.mrf.mxu0
  %v514 = vadd.f32 %v246, %v513
  %515 = vmatmul.f32.gmra.mxu0 %v386
  %v516 = vpop.f32.mrf.mxu0
  %v517 = vadd.f32 %v251, %v516
  %518 = vmatmul.f32.gmra.mxu0 %v389
  %v519 = vpop.f32.mrf.mxu0
  %v520 = vadd.f32 %v256, %v519
  %521 = vmatmul.f32.gmra.mxu0 %v392
  %v522 = vpop.f32.mrf.mxu0
  %v523 = vadd.f32 %v261, %v522
  %524 = vmatmul.f32.gmra.mxu0 %v395
  %v525 = vpop.f32.mrf.mxu0
  %v526 = vadd.f32 %v266, %v525
  %527 = vmatmul.f32.gmra.mxu0 %v398
  %v528 = vpop.f32.mrf.mxu0
  %v529 = vadd.f32 %v271, %v528
  %530 = vmatmul.f32.gmra.mxu0 %v401
  %v531 = vpop.f32.mrf.mxu0
  %v532 = vadd.f32 %v276, %v531
  %533 = vmatmul.f32.gmra.mxu0 %v404
  %v534 = vpop.f32.mrf.mxu0
  %v535 = vadd.f32 %v281, %v534
  %536 = vmatmul.f32.gmra.mxu0 %v407
  %v537 = vpop.f32.mrf.mxu0
  %v538 = vadd.f32 %v286, %v537
  %539 = vmatmul.f32.gmra.mxu0 %v410
  %v540 = vpop.f32.mrf.mxu0
  %v541 = vadd.f32 %v291, %v540
  %542 = vmatmul.f32.gmra.mxu0 %v413
  %v543 = vpop.f32.mrf.mxu0
  %v544 = vadd.f32 %v296, %v543
  %545 = vmatmul.f32.gmra.mxu0 %v416
  %v546 = vpop.f32.mrf.mxu0
  %v547 = vadd.f32 %v301, %v546
  %548 = vdwg.mxu0
  %v549 = vmax.f32 %v436, 0.0
  %v550 = vmax.f32 %v439, 0.0
  %v551 = vmax.f32 %v442, 0.0
  %v552 = vmax.f32 %v445, 0.0
  %v553 = vmax.f32 %v448, 0.0
  %v554 = vmax.f32 %v451, 0.0
  %v555 = vmax.f32 %v454, 0.0
  %v556 = vmax.f32 %v457, 0.0
  %v557 = vmax.f32 %v460, 0.0
  %v558 = vmax.f32 %v463, 0.0
  %v559 = vmax.f32 %v466, 0.0
  %v560 = vmax.f32 %v469, 0.0
  %v561 = vmax.f32 %v472, 0.0
  %v562 = vmax.f32 %v475, 0.0
  %v563 = vmax.f32 %v478, 0.0
  %v564 = vmax.f32 %v481, 0.0
  %v565 = vmax.f32 %v484, 0.0
  %v566 = vmax.f32 %v487, 0.0
  %v567 = vmax.f32 %v490, 0.0
  %v568 = vmax.f32 %v493, 0.0
  %v569 = vmax.f32 %v496, 0.0
  %v570 = vmax.f32 %v499, 0.0
  %v571 = vmax.f32 %v502, 0.0
  %v572 = vmax.f32 %v505, 0.0
  %v573 = vmax.f32 %v508, 0.0
  %v574 = vmax.f32 %v511, 0.0
  %v575 = vmax.f32 %v514, 0.0
  %v576 = vmax.f32 %v517, 0.0
  %v577 = vmax.f32 %v520, 0.0
  %v578 = vmax.f32 %v523, 0.0
  %v579 = vmax.f32 %v526, 0.0
  %v580 = vmax.f32 %v529, 0.0
  %v581 = vmax.f32 %v532, 0.0
  %v582 = vmax.f32 %v535, 0.0
  %v583 = vmax.f32 %v538, 0.0
  %v584 = vmax.f32 %v541, 0.0
  %v585 = vmax.f32 %v544, 0.0
  %v586 = vmax.f32 %v547, 0.0
  %v587 = vld [vmem:[%s2] sm:$0xff]
  %v588 = vld [vmem:[%s2 + $0x8] sm:$0xff]
  %v589 = vld [vmem:[%s2 + $0x10] sm:$0xff]
  %v590 = vld [vmem:[%s2 + $0x18] sm:$0xff]
  %v591 = vld [vmem:[%s2 + $0x20] sm:$0xff]
  %v592 = vld [vmem:[%s2 + $0x28] sm:$0xff]
  %v593 = vld [vmem:[%s2 + $0x30] sm:$0xff]
  %v594 = vld [vmem:[%s2 + $0x38] sm:$0xff]
  %v595 = vld [vmem:[%s2 + $0x40] sm:$0xff]
  %v596 = vld [vmem:[%s2 + $0x48] sm:$0xff]
  %v597 = vld [vmem:[%s2 + $0x50] sm:$0xff]
  %v598 = vld [vmem:[%s2 + $0x58] sm:$0xff]
  %v599 = vld [vmem:[%s2 + $0x60] sm:$0xff]
  %v600 = vld [vmem:[%s2 + $0x68] sm:$0xff]
  %v601 = vld [vmem:[%s2 + $0x70] sm:$0xff]
  %v602 = vld [vmem:[%s2 + $0x78] sm:$0xff]
  %v603 = vld [vmem:[%s2 + $0x80] sm:$0xff]
  %v604 = vld [vmem:[%s2 + $0x88] sm:$0xff]
  %v605 = vld [vmem:[%s2 + $0x90] sm:$0xff]
  %v606 = vld [vmem:[%s2 + $0x98] sm:$0xff]
  %v607 = vld [vmem:[%s2 + $0xa0] sm:$0xff]
  %v608 = vld [vmem:[%s2 + $0xa8] sm:$0xff]
  %v609 = vld [vmem:[%s2 + $0xb0] sm:$0xff]
  %v610 = vld [vmem:[%s2 + $0xb8] sm:$0xff]
  %v611 = vld [vmem:[%s2 + $0xc0] sm:$0xff]
  %v612 = vld [vmem:[%s2 + $0xc8] sm:$0xff]
  %v613 = vld [vmem:[%s2 + $0xd0] sm:$0xff]
  %v614 = vld [vmem:[%s2 + $0xd8] sm:$0xff]
  %v615 = vld [vmem:[%s2 + $0xe0] sm:$0xff]
  %v616 = vld [vmem:[%s2 + $0xe8] sm:$0xff]
  %v617 = vld [vmem:[%s2 + $0xf0] sm:$0xff]
  %v618 = vld [vmem:[%s2 + $0xf8] sm:$0xff]
  %v619 = vld [vmem:[%s2 + $0x100] sm:$0xff]
  %v620 = vld [vmem:[%s2 + $0x108] sm:$0xff]
  %v621 = vld [vmem:[%s2 + $0x110] sm:$0xff]
  %v622 = vld [vmem:[%s2 + $0x118] sm:$0xff]
  %v623 = vld [vmem:[%s2 + $0x120] sm:$0xf]
  %v624 = vld [vmem:[%s2 + $0x128] sm:$0xf]
  %v625 = vld [vmem:[%s2 + $0x130] sm:$0xf]
  %627 = vset.pattern.permute.xlu0 0
  %628 = vperm.xlu0 %627, %v60
  %v629 = vpop.permute.xlu0 %628
  %632 = vset.pattern.permute.xlu0 0
  %633 = vperm.xlu0 %632, %v61
  %v634 = vpop.permute.xlu0 %633
  %637 = vset.pattern.permute.xlu0 0
  %638 = vperm.xlu0 %637, %v62
  %v639 = vpop.permute.xlu0 %638
  %642 = vset.pattern.permute.xlu0 0
  %643 = vperm.xlu0 %642, %v63
  %v644 = vpop.permute.xlu0 %643
  %647 = vset.pattern.permute.xlu0 0
  %648 = vperm.xlu0 %647, %v64
  %v649 = vpop.permute.xlu0 %648
  %652 = vset.pattern.permute.xlu0 0
  %653 = vperm.xlu0 %652, %v65
  %v654 = vpop.permute.xlu0 %653
  %657 = vset.pattern.permute.xlu0 0
  %658 = vperm.xlu0 %657, %v66
  %v659 = vpop.permute.xlu0 %658
  %662 = vset.pattern.permute.xlu0 0
  %663 = vperm.xlu0 %662, %v67
  %v664 = vpop.permute.xlu0 %663
  %667 = vset.pattern.permute.xlu0 0
  %668 = vperm.xlu0 %667, %v68
  %v669 = vpop.permute.xlu0 %668
  %672 = vset.pattern.permute.xlu0 0
  %673 = vperm.xlu0 %672, %v69
  %v674 = vpop.permute.xlu0 %673
  %677 = vset.pattern.permute.xlu0 0
  %678 = vperm.xlu0 %677, %v70
  %v679 = vpop.permute.xlu0 %678
  %682 = vset.pattern.permute.xlu0 0
  %683 = vperm.xlu0 %682, %v71
  %v684 = vpop.permute.xlu0 %683
  %687 = vset.pattern.permute.xlu0 0
  %688 = vperm.xlu0 %687, %v72
  %v689 = vpop.permute.xlu0 %688
  %vm691 = vcmask 359424
  %v693 = vsel %vm691, %v589, 0
  %v696 = vsel %vm691, %v592, 0
  %v699 = vsel %vm691, %v595, 0
  %v702 = vsel %vm691, %v598, 0
  %v705 = vsel %vm691, %v601, 0
  %v708 = vsel %vm691, %v604, 0
  %v711 = vsel %vm691, %v607, 0
  %v714 = vsel %vm691, %v610, 0
  %v717 = vsel %vm691, %v613, 0
  %v720 = vsel %vm691, %v616, 0
  %v723 = vsel %vm691, %v619, 0
  %v726 = vsel %vm691, %v622, 0
  %v729 = vsel %vm691, %v625, 0
  %vm731 = vcmask 1043456
  %v733 = vsel %vm731, %v586, 0
  %735 = vmatpush.msra.mxu0 %v564
  %736 = vmatpush.msra.mxu0 %v563
  %737 = vmatpush.msra.mxu0 %v562
  %738 = vmatpush.msra.mxu0 %v561
  %739 = vmatpush.msra.mxu0 %v560
  %740 = vmatpush.msra.mxu0 %v559
  %741 = vmatpush.msra.mxu0 %v558
  %742 = vmatpush.msra.mxu0 %v557
  %743 = vmatpush.msra.mxu0 %v556
  %744 = vmatpush.msra.mxu0 %v555
  %745 = vmatpush.msra.mxu0 %v554
  %746 = vmatpush.msra.mxu0 %v553
  %747 = vmatpush.msra.mxu0 %v552
  %748 = vmatpush.msra.mxu0 %v551
  %749 = vmatpush.msra.mxu0 %v550
  %750 = vmatpush.msra.mxu0 %v549
  %751 = vmatmul.f32.gmra.mxu0 %v587
  %v752 = vpop.f32.mrf.mxu0
  %v753 = vadd.f32 %v629, %v752
  %754 = vmatmul.f32.gmra.mxu0 %v590
  %v755 = vpop.f32.mrf.mxu0
  %v756 = vadd.f32 %v634, %v755
  %757 = vmatmul.f32.gmra.mxu0 %v593
  %v758 = vpop.f32.mrf.mxu0
  %v759 = vadd.f32 %v639, %v758
  %760 = vmatmul.f32.gmra.mxu0 %v596
  %v761 = vpop.f32.mrf.mxu0
  %v762 = vadd.f32 %v644, %v761
  %763 = vmatmul.f32.gmra.mxu0 %v599
  %v764 = vpop.f32.mrf.mxu0
  %v765 = vadd.f32 %v649, %v764
  %766 = vmatmul.f32.gmra.mxu0 %v602
  %v767 = vpop.f32.mrf.mxu0
  %v768 = vadd.f32 %v654, %v767
  %769 = vmatmul.f32.gmra.mxu0 %v605
  %v770 = vpop.f32.mrf.mxu0
  %v771 = vadd.f32 %v659, %v770
  %772 = vmatmul.f32.gmra.mxu0 %v608
  %v773 = vpop.f32.mrf.mxu0
  %v774 = vadd.f32 %v664, %v773
  %775 = vmatmul.f32.gmra.mxu0 %v611
  %v776 = vpop.f32.mrf.mxu0
  %v777 = vadd.f32 %v669, %v776
  %778 = vmatmul.f32.gmra.mxu0 %v614
  %v779 = vpop.f32.mrf.mxu0
  %v780 = vadd.f32 %v674, %v779
  %781 = vmatmul.f32.gmra.mxu0 %v617
  %v782 = vpop.f32.mrf.mxu0
  %v783 = vadd.f32 %v679, %v782
  %784 = vmatmul.f32.gmra.mxu0 %v620
  %v785 = vpop.f32.mrf.mxu0
  %v786 = vadd.f32 %v684, %v785
  %787 = vmatmul.f32.gmra.mxu0 %v623
  %v788 = vpop.f32.mrf.mxu0
  %v789 = vadd.f32 %v689, %v788
  %790 = vdwg.mxu0
  %791 = vmatpush.msra.mxu0 %v580
  %792 = vmatpush.msra.mxu0 %v579
  %793 = vmatpush.msra.mxu0 %v578
  %794 = vmatpush.msra.mxu0 %v577
  %795 = vmatpush.msra.mxu0 %v576
  %796 = vmatpush.msra.mxu0 %v575
  %797 = vmatpush.msra.mxu0 %v574
  %798 = vmatpush.msra.mxu0 %v573
  %799 = vmatpush.msra.mxu0 %v572
  %800 = vmatpush.msra.mxu0 %v571
  %801 = vmatpush.msra.mxu0 %v570
  %802 = vmatpush.msra.mxu0 %v569
  %803 = vmatpush.msra.mxu0 %v568
  %804 = vmatpush.msra.mxu0 %v567
  %805 = vmatpush.msra.mxu0 %v566
  %806 = vmatpush.msra.mxu0 %v565
  %807 = vmatmul.f32.gmra.mxu0 %v588
  %v808 = vpop.f32.mrf.mxu0
  %v809 = vadd.f32 %v753, %v808
  %810 = vmatmul.f32.gmra.mxu0 %v591
  %v811 = vpop.f32.mrf.mxu0
  %v812 = vadd.f32 %v756, %v811
  %813 = vmatmul.f32.gmra.mxu0 %v594
  %v814 = vpop.f32.mrf.mxu0
  %v815 = vadd.f32 %v759, %v814
  %816 = vmatmul.f32.gmra.mxu0 %v597
  %v817 = vpop.f32.mrf.mxu0
  %v818 = vadd.f32 %v762, %v817
  %819 = vmatmul.f32.gmra.mxu0 %v600
  %v820 = vpop.f32.mrf.mxu0
  %v821 = vadd.f32 %v765, %v820
  %822 = vmatmul.f32.gmra.mxu0 %v603
  %v823 = vpop.f32.mrf.mxu0
  %v824 = vadd.f32 %v768, %v823
  %825 = vmatmul.f32.gmra.mxu0 %v606
  %v826 = vpop.f32.mrf.mxu0
  %v827 = vadd.f32 %v771, %v826
  %828 = vmatmul.f32.gmra.mxu0 %v609
  %v829 = vpop.f32.mrf.mxu0
  %v830 = vadd.f32 %v774, %v829
  %831 = vmatmul.f32.gmra.mxu0 %v612
  %v832 = vpop.f32.mrf.mxu0
  %v833 = vadd.f32 %v777, %v832
  %834 = vmatmul.f32.gmra.mxu0 %v615
  %v835 = vpop.f32.mrf.mxu0
  %v836 = vadd.f32 %v780, %v835
  %837 = vmatmul.f32.gmra.mxu0 %v618
  %v838 = vpop.f32.mrf.mxu0
  %v839 = vadd.f32 %v783, %v838
  %840 = vmatmul.f32.gmra.mxu0 %v621
  %v841 = vpop.f32.mrf.mxu0
  %v842 = vadd.f32 %v786, %v841
  %843 = vmatmul.f32.gmra.mxu0 %v624
  %v844 = vpop.f32.mrf.mxu0
  %v845 = vadd.f32 %v789, %v844
  %846 = vdwg.mxu0
  %847 = vmatpush.msra.mxu0 0.0
  %848 = vmatpush.msra.mxu0 0.0
  %849 = vmatpush.msra.mxu0 0.0
  %850 = vmatpush.msra.mxu0 0.0
  %851 = vmatpush.msra.mxu0 0.0
  %852 = vmatpush.msra.mxu0 0.0
  %853 = vmatpush.msra.mxu0 0.0
  %854 = vmatpush.msra.mxu0 0.0
  %855 = vmatpush.msra.mxu0 0.0
  %856 = vmatpush.msra.mxu0 0.0
  %857 = vmatpush.msra.mxu0 %v733
  %858 = vmatpush.msra.mxu0 %v585
  %859 = vmatpush.msra.mxu0 %v584
  %860 = vmatpush.msra.mxu0 %v583
  %861 = vmatpush.msra.mxu0 %v582
  %862 = vmatpush.msra.mxu0 %v581
  %863 = vmatmul.f32.gmra.mxu0 %v693
  %v864 = vpop.f32.mrf.mxu0
  %v865 = vadd.f32 %v809, %v864
  %866 = vmatmul.f32.gmra.mxu0 %v696
  %v867 = vpop.f32.mrf.mxu0
  %v868 = vadd.f32 %v812, %v867
  %869 = vmatmul.f32.gmra.mxu0 %v699
  %v870 = vpop.f32.mrf.mxu0
  %v871 = vadd.f32 %v815, %v870
  %872 = vmatmul.f32.gmra.mxu0 %v702
  %v873 = vpop.f32.mrf.mxu0
  %v874 = vadd.f32 %v818, %v873
  %875 = vmatmul.f32.gmra.mxu0 %v705
  %v876 = vpop.f32.mrf.mxu0
  %v877 = vadd.f32 %v821, %v876
  %878 = vmatmul.f32.gmra.mxu0 %v708
  %v879 = vpop.f32.mrf.mxu0
  %v880 = vadd.f32 %v824, %v879
  %881 = vmatmul.f32.gmra.mxu0 %v711
  %v882 = vpop.f32.mrf.mxu0
  %v883 = vadd.f32 %v827, %v882
  %884 = vmatmul.f32.gmra.mxu0 %v714
  %v885 = vpop.f32.mrf.mxu0
  %v886 = vadd.f32 %v830, %v885
  %887 = vmatmul.f32.gmra.mxu0 %v717
  %v888 = vpop.f32.mrf.mxu0
  %v889 = vadd.f32 %v833, %v888
  %890 = vmatmul.f32.gmra.mxu0 %v720
  %v891 = vpop.f32.mrf.mxu0
  %v892 = vadd.f32 %v836, %v891
  %893 = vmatmul.f32.gmra.mxu0 %v723
  %v894 = vpop.f32.mrf.mxu0
  %v895 = vadd.f32 %v839, %v894
  %896 = vmatmul.f32.gmra.mxu0 %v726
  %v897 = vpop.f32.mrf.mxu0
  %v898 = vadd.f32 %v842, %v897
  %899 = vmatmul.f32.gmra.mxu0 %v729
  %v900 = vpop.f32.mrf.mxu0
  %v901 = vadd.f32 %v845, %v900
  %902 = vdwg.mxu0
  %v903 = vmax.f32 %v865, 0.0
  %v904 = vmax.f32 %v868, 0.0
  %v905 = vmax.f32 %v871, 0.0
  %v906 = vmax.f32 %v874, 0.0
  %v907 = vmax.f32 %v877, 0.0
  %v908 = vmax.f32 %v880, 0.0
  %v909 = vmax.f32 %v883, 0.0
  %v910 = vmax.f32 %v886, 0.0
  %v911 = vmax.f32 %v889, 0.0
  %v912 = vmax.f32 %v892, 0.0
  %v913 = vmax.f32 %v895, 0.0
  %v914 = vmax.f32 %v898, 0.0
  %v915 = vmax.f32 %v901, 0.0
  %v916 = vld [vmem:[%s3] sm:$0xff]
  %v917 = vld [vmem:[%s3 + $0x8] sm:$0xff]
  %919 = vset.pattern.permute.xlu0 0
  %920 = vperm.xlu0 %919, %v73
  %v921 = vpop.permute.xlu0 %920
  %924 = vset.pattern.permute.xlu0 0
  %925 = vperm.xlu0 %924, %v74
  %v926 = vpop.permute.xlu0 %925
  %vm928 = vcmask 818176
  %v930 = vsel %vm928, %v916, 0
  %v933 = vsel %vm928, %v917, 0
  %v936 = vsel %vm731, %v915, 0
  %938 = vmatpush.msra.mxu0 0.0
  %939 = vmatpush.msra.mxu0 0.0
  %940 = vmatpush.msra.mxu0 0.0
  %941 = vmatpush.msra.mxu0 %v936
  %942 = vmatpush.msra.mxu0 %v914
  %943 = vmatpush.msra.mxu0 %v913
  %944 = vmatpush.msra.mxu0 %v912
  %945 = vmatpush.msra.mxu0 %v911
  %946 = vmatpush.msra.mxu0 %v910
  %947 = vmatpush.msra.mxu0 %v909
  %948 = vmatpush.msra.mxu0 %v908
  %949 = vmatpush.msra.mxu0 %v907
  %950 = vmatpush.msra.mxu0 %v906
  %951 = vmatpush.msra.mxu0 %v905
  %952 = vmatpush.msra.mxu0 %v904
  %953 = vmatpush.msra.mxu0 %v903
  %954 = vmatmul.f32.gmra.mxu0 %v930
  %v955 = vpop.f32.mrf.mxu0
  %v956 = vadd.f32 %v921, %v955
  %957 = vmatmul.f32.gmra.mxu0 %v933
  %v958 = vpop.f32.mrf.mxu0
  %v959 = vadd.f32 %v926, %v958
  %960 = vdwg.mxu0
  %v961 = vmul.f32 %v959, 0.5
  %v962 = vmul.f32 %v961, 1.442695
  %v963 = vpow.pop %v962
  %v964 = vmul.f32 %v963, %v21
  %v965 = vadd.f32 %v956, %v964
  %v967 = vrot.slane %v956, 6
  %v970 = vrot.slane %v959, 4
  %vm972 = vcmask 1041408
  %v973 = vsel %vm972, %v965, %v967
  %v974 = vsel %vm731, %v973, %v970
  %vm975 = vcmask 62464
  %976 = vst.msk [vmem:[%s5] sm:$0x3f] %vm975, %v974
  // Predicated region
  $region22: #{encoder_forward.1} parent=0 // pred_check
    _
  $region23: #{encoder_forward.1} parent=0 // pred_check_branch
    %978 = sbr.rel (0) target = $region25
  $region24: #{encoder_forward.1} parent=0 // pred_region
    _
  $region25: #{encoder_forward.1} parent=0 // pred_fallthru
    _
  // Predicated region
  $region26: #{encoder_forward.1} parent=0 // pred_check
    _
  $region27: #{encoder_forward.1} parent=0 // pred_check_branch
    %980 = sbr.rel (0) target = $region29
  $region28: #{encoder_forward.1} parent=0 // pred_region
    _
  $region29: #{encoder_forward.1} parent=0 // pred_fallthru
    _

</llo_original>
